<compile_context>
chip_gen: v7x
topology: tpu7x:2x2x1
jax: 0.10.0
libtpu: 0.0.40
codegen_flags: <defaults>
</compile_context>

<pallas_src>
import functools

import jax
import jax.numpy as jnp
from jax.experimental import pallas as pl
from jax.experimental.pallas import tpu as pltpu


def _round_up(x, m):
    return ((x + m - 1) // m) * m


def _device_kind():
    try:
        return jax.devices()[0].device_kind.lower()
    except Exception:
        return ""


def _vmem_capacity_bytes(kind):
    try:
        info = pltpu.get_tpu_info()
        cap = int(getattr(info, "vmem_capacity_bytes"))
        if cap > 0:
            return cap
    except Exception:
        pass
    # Conservative fallback if the query is unavailable.
    return (64 << 20) if "v7" in kind else (128 << 20)


def _choose_k_tile(d_in, d_out, w_sz, budget):
    """Pick the K (d_in) tile so the streamed weight fits the VMEM budget."""
    # Resident (single-buffered) weight if it fits comfortably, or if d_in is
    # not 128-aligned (partial K blocks would corrupt the accumulation).
    if d_in * d_out * w_sz <= budget // 2 or d_in % 128 != 0:
        return d_in
    for cand in range(d_in - 128, 0, -128):          # multiples of 128
        if d_in % cand == 0 and 2 * cand * d_out * w_sz <= budget // 2:
            return cand
    return 128


def _intermediate_output_kernel(x_ref, w_ref, b_ref, res_ref, g_ref, beta_ref,
                                o_ref, acc_ref, *, eps, d_out):
    # x_ref:    (TM, KT)     tile of hidden_states rows (native dtype)
    # w_ref:    (KT, D_out)  dense weight K-slab, (in, out) layout
    # b_ref:    (1, D_out)   dense bias (f32)
    # res_ref:  (TM, D_out)  residual tile (inputs)
    # g_ref:    (1, D_out)   layer-norm gamma (f32)
    # beta_ref: (1, D_out)   layer-norm beta (f32)
    # o_ref:    (TM, D_out)  output tile
    # acc_ref:  (TM, D_out)  f32 accumulator scratch
    k = pl.program_id(1)

    @pl.when(k == 0)
    def _():
        acc_ref[...] = jnp.zeros_like(acc_ref)

    # MXU matmul in the operands' native dtype, f32 accumulation.
    acc_ref[...] += jnp.dot(x_ref[...], w_ref[...],
                            preferred_element_type=jnp.float32)

    @pl.when(k == pl.num_programs(1) - 1)
    def _():
        # Dropout is identity in eval mode.
        y = acc_ref[...] + b_ref[...] + res_ref[...].astype(jnp.float32)
        inv_d = jnp.float32(1.0 / d_out)
        mean = jnp.sum(y, axis=-1, keepdims=True) * inv_d
        centered = y - mean
        var = jnp.sum(centered * centered, axis=-1, keepdims=True) * inv_d
        inv = jax.lax.rsqrt(var + jnp.float32(eps))
        o_ref[...] = (centered * inv * g_ref[...]
                      + beta_ref[...]).astype(o_ref.dtype)


def intermediate_output_layer(hidden_states, inputs, w, b, gamma, beta,
                              *, eps=1e-12, tile_rows=None, k_tile=None,
                              mxu_dtype=None):
    """hidden_states: (B, S, D_in); inputs: (B, S, D_out); w: (D_in, D_out)."""
    B, S, d_in = hidden_states.shape
    d_out = inputs.shape[-1]
    N = B * S
    out_dtype = inputs.dtype

    if mxu_dtype is not None:            # optional bf16 fast path for f32 inputs
        hidden_states = hidden_states.astype(mxu_dtype)
        w = w.astype(mxu_dtype)

    x_sz = jnp.dtype(hidden_states.dtype).itemsize
    r_sz = jnp.dtype(inputs.dtype).itemsize
    w_sz = jnp.dtype(w.dtype).itemsize
    o_sz = jnp.dtype(out_dtype).itemsize

    # ---- Generation-aware VMEM budget -------------------------------------
    kind = _device_kind()
    is_v5e = ("v5 lite" in kind) or ("v5e" in kind) or ("v5litepod" in kind)
    multi_core = ("v7" in kind) or ("v4" in kind) or ("v5" in kind and not is_v5e)
    phys_vmem = _vmem_capacity_bytes(kind)
    cap = min(int(phys_vmem * 0.8), phys_vmem - (8 << 20))   # ~51 MiB on v7x
    budget = cap - (4 << 20)

    # ---- K (d_in) tiling so the streamed weight fits the budget ------------
    if k_tile is not None and (d_in % k_tile != 0
                               or (k_tile != d_in and k_tile % 128 != 0)):
        k_tile = None
    if k_tile is None:
        k_tile = _choose_k_tile(d_in, d_out, w_sz, budget)
    k_steps = d_in // k_tile
    w_bufs = 1 if k_steps == 1 else 2            # resident weight single-buffered
    weight_bytes = w_bufs * k_tile * d_out * w_sz

    # ---- Row tile -----------------------------------------------------------
    row_align = {4: 8, 2: 16, 1: 32}.get(x_sz, 8)
    if tile_rows is None:
        tile_rows = 256 if is_v5e else 512       # bigger tiles on v6e/v7x
    tm = min(_round_up(tile_rows, row_align), _round_up(N, row_align))
    if multi_core:
        # Ensure >= 2 grid steps on the parallel row axis (feed both cores).
        tm = min(tm, max(_round_up(pl.cdiv(N, 2), row_align), row_align))
    tm = max(tm, row_align)

    def working_set(tm_):
        return (2 * tm_ * k_tile * x_sz          # x tiles (double-buffered)
                + weight_bytes                   # dense weight buffer(s)
                + 2 * tm_ * d_out * r_sz         # residual tiles
                + 2 * tm_ * d_out * o_sz         # output tiles
                + tm_ * d_out * 4                # f32 accumulator scratch
                + 3 * d_out * 4)                 # bias / gamma / beta (f32)

    while working_set(tm) > budget and tm > row_align:
        tm = max(_round_up(tm // 2, row_align), row_align)

    grid = (pl.cdiv(N, tm), k_steps)

    # Leave room for one extra weight buffer (double-buffered fallback path)
    # plus fixed headroom for Pallas-internal scratch.
    vmem_limit = int(min(max(working_set(tm) + k_tile * d_out * w_sz + (4 << 20),
                             16 << 20), cap))

    # ---- Operands (no host-side pad/slice for ragged N) --------------------
    x2 = hidden_states.reshape(N, d_in)
    r2 = inputs.reshape(N, d_out)
    b2 = b.astype(jnp.float32).reshape(1, d_out)
    g2 = gamma.astype(jnp.float32).reshape(1, d_out)
    beta2 = beta.astype(jnp.float32).reshape(1, d_out)

    cost = pl.CostEstimate(
        flops=2 * N * d_in * d_out,
        transcendentals=N,
        bytes_accessed=(N * d_in * x_sz + N * d_out * (r_sz + o_sz)
                        + d_in * d_out * w_sz + 3 * d_out * 4))

    kernel = functools.partial(_intermediate_output_kernel, eps=eps, d_out=d_out)

    def build(single_buffer_invariants):
        def const_spec(shape, index_map):
            if single_buffer_invariants and hasattr(pl, "Buffered"):
                return pl.BlockSpec(shape, index_map,
                                    pipeline_mode=pl.Buffered(1))
            return pl.BlockSpec(shape, index_map)

        if k_steps == 1:   # grid-invariant resident weight -> single buffer
            w_spec = const_spec((k_tile, d_out), lambda i, k: (0, 0))
        else:              # streamed along K -> keep double buffering
            w_spec = pl.BlockSpec((k_tile, d_out), lambda i, k: (k, 0))

        return pl.pallas_call(
            kernel,
            out_shape=jax.ShapeDtypeStruct((N, d_out), out_dtype),
            grid_spec=pltpu.PrefetchScalarGridSpec(
                num_scalar_prefetch=0,
                grid=grid,
                in_specs=[
                    pl.BlockSpec((tm, k_tile), lambda i, k: (i, k)),   # x
                    w_spec,                                            # weight
                    const_spec((1, d_out), lambda i, k: (0, 0)),       # bias
                    pl.BlockSpec((tm, d_out), lambda i, k: (i, 0)),    # residual
                    const_spec((1, d_out), lambda i, k: (0, 0)),       # gamma
                    const_spec((1, d_out), lambda i, k: (0, 0)),       # beta
                ],
                out_specs=pl.BlockSpec((tm, d_out), lambda i, k: (i, 0)),
                scratch_shapes=[pltpu.VMEM((tm, d_out), jnp.float32)],
            ),
            compiler_params=pltpu.CompilerParams(
                dimension_semantics=("parallel", "arbitrary"),
                vmem_limit_bytes=vmem_limit),
            cost_estimate=cost,
        )

    try:
        out2 = build(True)(x2, w, b2, r2, g2, beta2)
    except Exception:
        # Older/stricter builds may reject pipeline_mode=pl.Buffered(1);
        # retry with default (double) buffering for the invariant operands.
        out2 = build(False)(x2, w, b2, r2, g2, beta2)

    return out2.reshape(B, S, d_out)


def reference(hidden_states, inputs, w, b, gamma, beta, eps=1e-12):
    h = jnp.einsum("bsi,io->bso",
                   hidden_states.astype(jnp.float32), w.astype(jnp.float32),
                   precision=jax.lax.Precision.HIGHEST) + b.astype(jnp.float32)
    y = h + inputs.astype(jnp.float32)
    mean = jnp.mean(y, axis=-1, keepdims=True)
    var = jnp.mean((y - mean) ** 2, axis=-1, keepdims=True)
    out = ((y - mean) / jnp.sqrt(var + eps) * gamma.astype(jnp.float32)
           + beta.astype(jnp.float32))
    return out.astype(inputs.dtype)


def _make_case(key, B, S, hidden_size, dtype=jnp.float32):
    intermediate_size = hidden_size // 2
    k1, k2, k3, k4, k5, k6 = jax.random.split(key, 6)
    hidden_states = jax.random.normal(k1, (B, S, intermediate_size), dtype)
    inputs = jax.random.normal(k2, (B, S, hidden_size), dtype)
    bound = 1.0 / (intermediate_size ** 0.5)
    w = jax.random.uniform(k3, (intermediate_size, hidden_size), dtype,
                           minval=-bound, maxval=bound)
    b = jax.random.uniform(k4, (hidden_size,), dtype, minval=-bound, maxval=bound)
    gamma = (1.0 + 0.1 * jax.random.normal(k5, (hidden_size,))).astype(dtype)
    beta = (0.1 * jax.random.normal(k6, (hidden_size,))).astype(dtype)
    return hidden_states, inputs, w, b, gamma, beta


if __name__ == "__main__":
    ks = jax.random.split(jax.random.PRNGKey(0), 5)

    # Case 1: module-spec shapes (hidden=32 -> intermediate=16), B=2, S=8, f32.
    args = _make_case(ks[0], B=2, S=8, hidden_size=32)
    out = jax.block_until_ready(intermediate_output_layer(*args))
    assert out.shape == (2, 8, 32)
    assert jnp.allclose(out, reference(*args), atol=2e-3, rtol=2e-3), "small case"

    # Case 2: ragged token count (partial last row tile, no host pad/slice).
    args = _make_case(ks[1], B=2, S=5, hidden_size=32)
    out = jax.block_until_ready(intermediate_output_layer(*args))
    assert out.shape == (2, 5, 32)
    assert jnp.allclose(out, reference(*args), atol=2e-3, rtol=2e-3), "ragged case"

    # Case 3: larger f32 case (multi-step row grid on multi-core parts).
    args = _make_case(ks[2], B=4, S=128, hidden_size=256)
    out = jax.block_until_ready(intermediate_output_layer(*args))
    assert out.shape == (4, 128, 256)
    assert jnp.allclose(out, reference(*args), atol=3e-3, rtol=3e-3), "big case"

    # Case 4: K-tiled reduction path (d_in=256 split into two 128-wide K steps).
    args = _make_case(ks[3], B=2, S=64, hidden_size=512)
    out = jax.block_until_ready(intermediate_output_layer(*args, k_tile=128))
    assert out.shape == (2, 64, 512)
    assert jnp.allclose(out, reference(*args), atol=3e-3, rtol=3e-3), "k-tiled case"

    # Case 5: native bf16 operands (full-rate MXU path).
    args = _make_case(ks[4], B=4, S=128, hidden_size=256, dtype=jnp.bfloat16)
    out = jax.block_until_ready(intermediate_output_layer(*args))
    assert out.shape == (4, 128, 256)
    assert jnp.allclose(out.astype(jnp.float32),
                        reference(*args).astype(jnp.float32),
                        atol=3e-2, rtol=3e-2), "bf16 case"

    print("KERNEL_OK")
</pallas_src>

<mosaic_0001>
module attributes {stable_mosaic.version = 11 : i64} {
  func.func @_intermediate_output_kernel(%arg0: i32, %arg1: i32, %arg2: memref<16x16xf32, #tpu.memory_space<vmem>>, %arg3: memref<16x32xf32, #tpu.memory_space<vmem>>, %arg4: memref<1x32xf32, #tpu.memory_space<vmem>>, %arg5: memref<16x32xf32, #tpu.memory_space<vmem>>, %arg6: memref<1x32xf32, #tpu.memory_space<vmem>>, %arg7: memref<1x32xf32, #tpu.memory_space<vmem>>, %arg8: memref<16x32xf32, #tpu.memory_space<vmem>>, %arg9: memref<16x32xf32, #tpu.memory_space<vmem>>) attributes {dimension_semantics = [#tpu.dimension_semantics<parallel>, #tpu.dimension_semantics<arbitrary>], iteration_bounds = array<i64: 1, 1>, scalar_prefetch = 0 : i64, scratch_operands = 1 : i64, tpu.core_type = #tpu.core_type<tc>, window_params = [{transform_indices = @transform_0, window_bounds = array<i64: 16, 16>}, {pipeline_mode = #tpu.pipeline_mode<synchronous>, transform_indices = @transform_1, window_bounds = array<i64: 16, 32>}, {pipeline_mode = #tpu.pipeline_mode<synchronous>, transform_indices = @transform_2, window_bounds = array<i64: 1, 32>}, {transform_indices = @transform_3, window_bounds = array<i64: 16, 32>}, {pipeline_mode = #tpu.pipeline_mode<synchronous>, transform_indices = @transform_4, window_bounds = array<i64: 1, 32>}, {pipeline_mode = #tpu.pipeline_mode<synchronous>, transform_indices = @transform_5, window_bounds = array<i64: 1, 32>}, {transform_indices = @transform_6, window_bounds = array<i64: 16, 32>}]} {
    %c0_i32 = arith.constant 0 : i32
    %0 = arith.cmpi eq, %arg1, %c0_i32 : i32
    %1 = arith.extui %0 : i1 to i32
    %c0_i32_0 = arith.constant 0 : i32
    %2 = arith.cmpi ne, %1, %c0_i32_0 : i32
    scf.if %2 {
      %cst_10 = arith.constant 0.000000e+00 : f32
      %12 = vector.broadcast %cst_10 : f32 to vector<16x32xf32>
      %c0_11 = arith.constant 0 : index
      %c0_12 = arith.constant 0 : index
      %13 = vector.load %arg9[%c0_11, %c0_12] : memref<16x32xf32, #tpu.memory_space<vmem>>, vector<16x32xf32>
      tpu.vector_store %arg9[%c0_11, %c0_12], %12 {strides = array<i32>} : memref<16x32xf32, #tpu.memory_space<vmem>>, vector<16x32xf32>,
    } else {
    }
    %c0 = arith.constant 0 : index
    %c0_1 = arith.constant 0 : index
    %3 = vector.load %arg9[%c0, %c0_1] : memref<16x32xf32, #tpu.memory_space<vmem>>, vector<16x32xf32>
    %c0_2 = arith.constant 0 : index
    %c0_3 = arith.constant 0 : index
    %4 = vector.load %arg2[%c0_2, %c0_3] : memref<16x16xf32, #tpu.memory_space<vmem>>, vector<16x16xf32>
    %c0_4 = arith.constant 0 : index
    %c0_5 = arith.constant 0 : index
    %5 = vector.load %arg3[%c0_4, %c0_5] : memref<16x32xf32, #tpu.memory_space<vmem>>, vector<16x32xf32>
    %cst = arith.constant dense<0.000000e+00> : vector<16x32xf32>
    %6 = tpu.matmul %4, %5, %cst {dimension_numbers = #tpu.dot_dimension_numbers<[1], [0], [0], [1], [0, 0, 1, 1], [], []>} : vector<16x16xf32>, vector<16x32xf32>, vector<16x32xf32> -> vector<16x32xf32>
    %7 = arith.addf %3, %6 : vector<16x32xf32>
    %c0_6 = arith.constant 0 : index
    %c0_7 = arith.constant 0 : index
    %8 = vector.load %arg9[%c0_6, %c0_7] : memref<16x32xf32, #tpu.memory_space<vmem>>, vector<16x32xf32>
    tpu.vector_store %arg9[%c0_6, %c0_7], %7 {strides = array<i32>} : memref<16x32xf32, #tpu.memory_space<vmem>>, vector<16x32xf32>,
    %c0_i32_8 = arith.constant 0 : i32
    %9 = arith.cmpi eq, %arg1, %c0_i32_8 : i32
    %10 = arith.extui %9 : i1 to i32
    %c0_i32_9 = arith.constant 0 : i32
    %11 = arith.cmpi ne, %10, %c0_i32_9 : i32
    scf.if %11 {
      %c0_10 = arith.constant 0 : index
      %c0_11 = arith.constant 0 : index
      %12 = vector.load %arg9[%c0_10, %c0_11] : memref<16x32xf32, #tpu.memory_space<vmem>>, vector<16x32xf32>
      %c0_12 = arith.constant 0 : index
      %c0_13 = arith.constant 0 : index
      %13 = vector.load %arg4[%c0_12, %c0_13] : memref<1x32xf32, #tpu.memory_space<vmem>>, vector<1x32xf32>
      %14 = vector.broadcast %13 : vector<1x32xf32> to vector<16x32xf32>
      %15 = arith.addf %12, %14 : vector<16x32xf32>
      %c0_14 = arith.constant 0 : index
      %c0_15 = arith.constant 0 : index
      %16 = vector.load %arg5[%c0_14, %c0_15] : memref<16x32xf32, #tpu.memory_space<vmem>>, vector<16x32xf32>
      %17 = arith.addf %15, %16 : vector<16x32xf32>
      %cst_16 = arith.constant dense<0.000000e+00> : vector<16xf32>
      %18 = vector.multi_reduction <add>, %17, %cst_16 [1] : vector<16x32xf32> to vector<16xf32>
      %19 = vector.shape_cast %18 : vector<16xf32> to vector<16x1xf32>
      %cst_17 = arith.constant 3.125000e-02 : f32
      %20 = vector.broadcast %cst_17 : f32 to vector<16x1xf32>
      %21 = arith.mulf %19, %20 : vector<16x1xf32>
      %22 = vector.broadcast %21 : vector<16x1xf32> to vector<16x32xf32>
      %23 = arith.subf %17, %22 : vector<16x32xf32>
      %24 = arith.mulf %23, %23 : vector<16x32xf32>
      %cst_18 = arith.constant dense<0.000000e+00> : vector<16xf32>
      %25 = vector.multi_reduction <add>, %24, %cst_18 [1] : vector<16x32xf32> to vector<16xf32>
      %26 = vector.shape_cast %25 : vector<16xf32> to vector<16x1xf32>
      %cst_19 = arith.constant 3.125000e-02 : f32
      %27 = vector.broadcast %cst_19 : f32 to vector<16x1xf32>
      %28 = arith.mulf %26, %27 : vector<16x1xf32>
      %cst_20 = arith.constant 9.99999996E-13 : f32
      %29 = vector.broadcast %cst_20 : f32 to vector<16x1xf32>
      %30 = arith.addf %28, %29 : vector<16x1xf32>
      %31 = math.rsqrt %30 : vector<16x1xf32>
      %32 = vector.broadcast %31 : vector<16x1xf32> to vector<16x32xf32>
      %33 = arith.mulf %23, %32 : vector<16x32xf32>
      %c0_21 = arith.constant 0 : index
      %c0_22 = arith.constant 0 : index
      %34 = vector.load %arg6[%c0_21, %c0_22] : memref<1x32xf32, #tpu.memory_space<vmem>>, vector<1x32xf32>
      %35 = vector.broadcast %34 : vector<1x32xf32> to vector<16x32xf32>
      %36 = arith.mulf %33, %35 : vector<16x32xf32>
      %c0_23 = arith.constant 0 : index
      %c0_24 = arith.constant 0 : index
      %37 = vector.load %arg7[%c0_23, %c0_24] : memref<1x32xf32, #tpu.memory_space<vmem>>, vector<1x32xf32>
      %38 = vector.broadcast %37 : vector<1x32xf32> to vector<16x32xf32>
      %39 = arith.addf %36, %38 : vector<16x32xf32>
      %c0_25 = arith.constant 0 : index
      %c0_26 = arith.constant 0 : index
      %40 = vector.load %arg8[%c0_25, %c0_26] : memref<16x32xf32, #tpu.memory_space<vmem>>, vector<16x32xf32>
      tpu.vector_store %arg8[%c0_25, %c0_26], %39 {strides = array<i32>} : memref<16x32xf32, #tpu.memory_space<vmem>>, vector<16x32xf32>,
    } else {
    }
    return
  }
  func.func @transform_0(%arg0: i32, %arg1: i32) -> (i32, i32) {
    %c0_i32 = arith.constant 0 : i32
    return %arg0, %arg1 : i32, i32
  }
  func.func @transform_1(%arg0: i32, %arg1: i32) -> (i32, i32) {
    %c0_i32 = arith.constant 0 : i32
    %c0_i32_0 = arith.constant 0 : i32
    %c0_i32_1 = arith.constant 0 : i32
    return %c0_i32, %c0_i32_0 : i32, i32
  }
  func.func @transform_2(%arg0: i32, %arg1: i32) -> (i32, i32) {
    %c0_i32 = arith.constant 0 : i32
    %c0_i32_0 = arith.constant 0 : i32
    %c0_i32_1 = arith.constant 0 : i32
    return %c0_i32, %c0_i32_0 : i32, i32
  }
  func.func @transform_3(%arg0: i32, %arg1: i32) -> (i32, i32) {
    %c0_i32 = arith.constant 0 : i32
    %c0_i32_0 = arith.constant 0 : i32
    return %arg0, %c0_i32 : i32, i32
  }
  func.func @transform_4(%arg0: i32, %arg1: i32) -> (i32, i32) {
    %c0_i32 = arith.constant 0 : i32
    %c0_i32_0 = arith.constant 0 : i32
    %c0_i32_1 = arith.constant 0 : i32
    return %c0_i32, %c0_i32_0 : i32, i32
  }
  func.func @transform_5(%arg0: i32, %arg1: i32) -> (i32, i32) {
    %c0_i32 = arith.constant 0 : i32
    %c0_i32_0 = arith.constant 0 : i32
    %c0_i32_1 = arith.constant 0 : i32
    return %c0_i32, %c0_i32_0 : i32, i32
  }
  func.func @transform_6(%arg0: i32, %arg1: i32) -> (i32, i32) {
    %c0_i32 = arith.constant 0 : i32
    %c0_i32_0 = arith.constant 0 : i32
    return %arg0, %c0_i32 : i32, i32
  }
}

module attributes {stable_mosaic.version = 11 : i64} {
  func.func @_intermediate_output_kernel(%arg0: i32, %arg1: i32, %arg2: memref<16x16xf32, #tpu.memory_space<vmem>>, %arg3: memref<16x32xf32, #tpu.memory_space<vmem>>, %arg4: memref<1x32xf32, #tpu.memory_space<vmem>>, %arg5: memref<16x32xf32, #tpu.memory_space<vmem>>, %arg6: memref<1x32xf32, #tpu.memory_space<vmem>>, %arg7: memref<1x32xf32, #tpu.memory_space<vmem>>, %arg8: memref<16x32xf32, #tpu.memory_space<vmem>>, %arg9: memref<16x32xf32, #tpu.memory_space<vmem>>) attributes {dimension_semantics = [#tpu.dimension_semantics<parallel>, #tpu.dimension_semantics<arbitrary>], iteration_bounds = array<i64: 1, 1>, scalar_prefetch = 0 : i64, scratch_operands = 1 : i64, tpu.core_type = #tpu.core_type<tc>, window_params = [{transform_indices = @transform_0, window_bounds = array<i64: 16, 16>}, {pipeline_mode = #tpu.pipeline_mode<synchronous>, transform_indices = @transform_1, window_bounds = array<i64: 16, 32>}, {pipeline_mode = #tpu.pipeline_mode<synchronous>, transform_indices = @transform_2, window_bounds = array<i64: 1, 32>}, {transform_indices = @transform_3, window_bounds = array<i64: 16, 32>}, {pipeline_mode = #tpu.pipeline_mode<synchronous>, transform_indices = @transform_4, window_bounds = array<i64: 1, 32>}, {pipeline_mode = #tpu.pipeline_mode<synchronous>, transform_indices = @transform_5, window_bounds = array<i64: 1, 32>}, {transform_indices = @transform_6, window_bounds = array<i64: 16, 32>}]} {
    %c0_i32 = arith.constant 0 : i32
    %0 = arith.cmpi eq, %arg1, %c0_i32 : i32
    %1 = arith.extui %0 : i1 to i32
    %c0_i32_0 = arith.constant 0 : i32
    %2 = arith.cmpi ne, %1, %c0_i32_0 : i32
    scf.if %2 {
      %cst_10 = arith.constant 0.000000e+00 : f32
      %12 = vector.broadcast %cst_10 : f32 to vector<16x32xf32>
      %c0_11 = arith.constant 0 : index
      %c0_12 = arith.constant 0 : index
      %13 = vector.load %arg9[%c0_11, %c0_12] : memref<16x32xf32, #tpu.memory_space<vmem>>, vector<16x32xf32>
      tpu.vector_store %arg9[%c0_11, %c0_12], %12 {strides = array<i32>} : memref<16x32xf32, #tpu.memory_space<vmem>>, vector<16x32xf32>,
    } else {
    }
    %c0 = arith.constant 0 : index
    %c0_1 = arith.constant 0 : index
    %3 = vector.load %arg9[%c0, %c0_1] : memref<16x32xf32, #tpu.memory_space<vmem>>, vector<16x32xf32>
    %c0_2 = arith.constant 0 : index
    %c0_3 = arith.constant 0 : index
    %4 = vector.load %arg2[%c0_2, %c0_3] : memref<16x16xf32, #tpu.memory_space<vmem>>, vector<16x16xf32>
    %c0_4 = arith.constant 0 : index
    %c0_5 = arith.constant 0 : index
    %5 = vector.load %arg3[%c0_4, %c0_5] : memref<16x32xf32, #tpu.memory_space<vmem>>, vector<16x32xf32>
    %cst = arith.constant dense<0.000000e+00> : vector<16x32xf32>
    %6 = tpu.matmul %4, %5, %cst {dimension_numbers = #tpu.dot_dimension_numbers<[1], [0], [0], [1], [0, 0, 1, 1], [], []>} : vector<16x16xf32>, vector<16x32xf32>, vector<16x32xf32> -> vector<16x32xf32>
    %7 = arith.addf %3, %6 : vector<16x32xf32>
    %c0_6 = arith.constant 0 : index
    %c0_7 = arith.constant 0 : index
    %8 = vector.load %arg9[%c0_6, %c0_7] : memref<16x32xf32, #tpu.memory_space<vmem>>, vector<16x32xf32>
    tpu.vector_store %arg9[%c0_6, %c0_7], %7 {strides = array<i32>} : memref<16x32xf32, #tpu.memory_space<vmem>>, vector<16x32xf32>,
    %c0_i32_8 = arith.constant 0 : i32
    %9 = arith.cmpi eq, %arg1, %c0_i32_8 : i32
    %10 = arith.extui %9 : i1 to i32
    %c0_i32_9 = arith.constant 0 : i32
    %11 = arith.cmpi ne, %10, %c0_i32_9 : i32
    scf.if %11 {
      %c0_10 = arith.constant 0 : index
      %c0_11 = arith.constant 0 : index
      %12 = vector.load %arg9[%c0_10, %c0_11] : memref<16x32xf32, #tpu.memory_space<vmem>>, vector<16x32xf32>
      %c0_12 = arith.constant 0 : index
      %c0_13 = arith.constant 0 : index
      %13 = vector.load %arg4[%c0_12, %c0_13] : memref<1x32xf32, #tpu.memory_space<vmem>>, vector<1x32xf32>
      %14 = vector.broadcast %13 : vector<1x32xf32> to vector<16x32xf32>
      %15 = arith.addf %12, %14 : vector<16x32xf32>
      %c0_14 = arith.constant 0 : index
      %c0_15 = arith.constant 0 : index
      %16 = vector.load %arg5[%c0_14, %c0_15] : memref<16x32xf32, #tpu.memory_space<vmem>>, vector<16x32xf32>
      %17 = arith.addf %15, %16 : vector<16x32xf32>
      %cst_16 = arith.constant dense<0.000000e+00> : vector<16xf32>
      %18 = vector.multi_reduction <add>, %17, %cst_16 [1] : vector<16x32xf32> to vector<16xf32>
      %19 = vector.shape_cast %18 : vector<16xf32> to vector<16x1xf32>
      %cst_17 = arith.constant 3.125000e-02 : f32
      %20 = vector.broadcast %cst_17 : f32 to vector<16x1xf32>
      %21 = arith.mulf %19, %20 : vector<16x1xf32>
      %22 = vector.broadcast %21 : vector<16x1xf32> to vector<16x32xf32>
      %23 = arith.subf %17, %22 : vector<16x32xf32>
      %24 = arith.mulf %23, %23 : vector<16x32xf32>
      %cst_18 = arith.constant dense<0.000000e+00> : vector<16xf32>
      %25 = vector.multi_reduction <add>, %24, %cst_18 [1] : vector<16x32xf32> to vector<16xf32>
      %26 = vector.shape_cast %25 : vector<16xf32> to vector<16x1xf32>
      %cst_19 = arith.constant 3.125000e-02 : f32
      %27 = vector.broadcast %cst_19 : f32 to vector<16x1xf32>
      %28 = arith.mulf %26, %27 : vector<16x1xf32>
      %cst_20 = arith.constant 9.99999996E-13 : f32
      %29 = vector.broadcast %cst_20 : f32 to vector<16x1xf32>
      %30 = arith.addf %28, %29 : vector<16x1xf32>
      %31 = math.rsqrt %30 : vector<16x1xf32>
      %32 = vector.broadcast %31 : vector<16x1xf32> to vector<16x32xf32>
      %33 = arith.mulf %23, %32 : vector<16x32xf32>
      %c0_21 = arith.constant 0 : index
      %c0_22 = arith.constant 0 : index
      %34 = vector.load %arg6[%c0_21, %c0_22] : memref<1x32xf32, #tpu.memory_space<vmem>>, vector<1x32xf32>
      %35 = vector.broadcast %34 : vector<1x32xf32> to vector<16x32xf32>
      %36 = arith.mulf %33, %35 : vector<16x32xf32>
      %c0_23 = arith.constant 0 : index
      %c0_24 = arith.constant 0 : index
      %37 = vector.load %arg7[%c0_23, %c0_24] : memref<1x32xf32, #tpu.memory_space<vmem>>, vector<1x32xf32>
      %38 = vector.broadcast %37 : vector<1x32xf32> to vector<16x32xf32>
      %39 = arith.addf %36, %38 : vector<16x32xf32>
      %c0_25 = arith.constant 0 : index
      %c0_26 = arith.constant 0 : index
      %40 = vector.load %arg8[%c0_25, %c0_26] : memref<16x32xf32, #tpu.memory_space<vmem>>, vector<16x32xf32>
      tpu.vector_store %arg8[%c0_25, %c0_26], %39 {strides = array<i32>} : memref<16x32xf32, #tpu.memory_space<vmem>>, vector<16x32xf32>,
    } else {
    }
    return
  }
  func.func @transform_0(%arg0: i32, %arg1: i32) -> (i32, i32) {
    %c0_i32 = arith.constant 0 : i32
    return %arg0, %arg1 : i32, i32
  }
  func.func @transform_1(%arg0: i32, %arg1: i32) -> (i32, i32) {
    %c0_i32 = arith.constant 0 : i32
    %c0_i32_0 = arith.constant 0 : i32
    %c0_i32_1 = arith.constant 0 : i32
    return %c0_i32, %c0_i32_0 : i32, i32
  }
  func.func @transform_2(%arg0: i32, %arg1: i32) -> (i32, i32) {
    %c0_i32 = arith.constant 0 : i32
    %c0_i32_0 = arith.constant 0 : i32
    %c0_i32_1 = arith.constant 0 : i32
    return %c0_i32, %c0_i32_0 : i32, i32
  }
  func.func @transform_3(%arg0: i32, %arg1: i32) -> (i32, i32) {
    %c0_i32 = arith.constant 0 : i32
    %c0_i32_0 = arith.constant 0 : i32
    return %arg0, %c0_i32 : i32, i32
  }
  func.func @transform_4(%arg0: i32, %arg1: i32) -> (i32, i32) {
    %c0_i32 = arith.constant 0 : i32
    %c0_i32_0 = arith.constant 0 : i32
    %c0_i32_1 = arith.constant 0 : i32
    return %c0_i32, %c0_i32_0 : i32, i32
  }
  func.func @transform_5(%arg0: i32, %arg1: i32) -> (i32, i32) {
    %c0_i32 = arith.constant 0 : i32
    %c0_i32_0 = arith.constant 0 : i32
    %c0_i32_1 = arith.constant 0 : i32
    return %c0_i32, %c0_i32_0 : i32, i32
  }
  func.func @transform_6(%arg0: i32, %arg1: i32) -> (i32, i32) {
    %c0_i32 = arith.constant 0 : i32
    %c0_i32_0 = arith.constant 0 : i32
    return %arg0, %c0_i32 : i32, i32
  }
}

</mosaic_0001>

<llo_original>
// kernel: tpu_custom_call.1
$region0: #{tpu_custom_call.1}
  #allocation0 [shape = 'u32[]', space=smem, size = 0x4, offset = 0x4, fixed_abs, tag = 'smem constant byte address 0x4 - core index']
  #allocation1 [shape = 'u32[144,128]{1,0:T(1,128)}', space=vmem, size = 0x12000, scoped, tag = 'internal scratch']
  #allocation2 [shape = 'f32[16,32]{1,0:T(8,128)}', space=vmem, size = 0x2000, scoped, tag = 'scratch operand']
  %s0 = inlined_call_operand.hbm [shape: f32[16,16], index: 0, kind: input, shape index: {}]
  %s1 = inlined_call_operand.hbm [shape: f32[16,32], index: 1, kind: input, shape index: {}]
  %s2 = inlined_call_operand.vmem [shape: f32[1,32], index: 2, kind: input, shape index: {}]
  %s3 = inlined_call_operand.hbm [shape: f32[16,32], index: 3, kind: input, shape index: {}]
  %s4 = inlined_call_operand.vmem [shape: f32[1,32], index: 4, kind: input, shape index: {}]
  %s5 = inlined_call_operand.vmem [shape: f32[1,32], index: 5, kind: input, shape index: {}]
  %s6 = inlined_call_operand.hbm [shape: f32[16,32], index: 6, kind: output, shape index: {}]
  %s7 = sld [smem:[#allocation0]]
  $region54: #{tpu_custom_call.1} parent=0
    _
  %s9 = ssub.s32 1, %s7
  %s10 = scalar_select 0, %s9, %s7
  $region1: #{tpu_custom_call.1} parent=0
    #allocation3 [shape = 'u8[8192]{0}', space=vmem, size = 0x2000, scoped, tag = 'input window, operand 0, single buffered']
    #allocation4 [shape = 's32[1]{0}', space=sflag, size = 0x4, scoped, tag = 'scoped memory for tpu_custom_call.1']
    #allocation5 [shape = 's32[1]{0}', space=sflag, size = 0x4, scoped, tag = 'scoped memory for tpu_custom_call.1']
    #allocation6 [shape = 'u8[8192]{0}', space=vmem, size = 0x2000, scoped, tag = 'input window, operand 1, single buffered']
    #allocation7 [shape = 's32[1]{0}', space=sflag, size = 0x4, scoped, tag = 'scoped memory for tpu_custom_call.1']
    #allocation8 [shape = 'u8[8192]{0}', space=vmem, size = 0x2000, scoped, tag = 'input window, operand 3, single buffered']
    #allocation9 [shape = 'u8[8192]{0}', space=vmem, size = 0x2000, scoped, tag = 'output window, operand 0, single buffered']
    %11 = vsyncpa [#allocation4], 0
    %12 = vsyncpa [#allocation7], 0
    %13 = vsyncpa [#allocation5], 0
    // Predicated region
    $region2: #{tpu_custom_call.1} parent=1 // pred_check
      _
    $region3: #{tpu_custom_call.1} parent=1 // pred_check_branch
      %15 = sbr.rel (0) target = $region5
    $region4: #{tpu_custom_call.1} parent=1 // pred_region
      %s17 = ssub.s32 256, 256
      %18 = vsyncadd [#allocation4], %s17
      %s19 = sshll.u32 [#allocation3], 4
      %s20 = int_to_ptr.vmem [resolvable:$true] %s19
      %25 = dma.hbm_to_vmem [thread:$0]  %s0, 256, %s20, [#allocation4], 128, 128, 8
    $region5: #{tpu_custom_call.1} parent=1 // pred_fallthru
      _
    // Predicated region
    $region6: #{tpu_custom_call.1} parent=1 // pred_check
      _
    $region7: #{tpu_custom_call.1} parent=1 // pred_check_branch
      %27 = sbr.rel (0) target = $region9
    $region8: #{tpu_custom_call.1} parent=1 // pred_region
      %s29 = ssub.s32 256, 256
      %30 = vsyncadd [#allocation7], %s29
      %s31 = sshll.u32 [#allocation6], 4
      %s32 = int_to_ptr.vmem [resolvable:$true] %s31
      %37 = dma.hbm_to_vmem [thread:$0]  %s1, 256, %s32, [#allocation7], 128, 128, 8
    $region9: #{tpu_custom_call.1} parent=1 // pred_fallthru
      _
    // Predicated region
    $region10: #{tpu_custom_call.1} parent=1 // pred_check
      _
    $region11: #{tpu_custom_call.1} parent=1 // pred_check_branch
      %39 = sbr.rel (0) target = $region13
    $region12: #{tpu_custom_call.1} parent=1 // pred_region
      _
    $region13: #{tpu_custom_call.1} parent=1 // pred_fallthru
      _
    // Predicated region
    $region14: #{tpu_custom_call.1} parent=1 // pred_check
      _
    $region15: #{tpu_custom_call.1} parent=1 // pred_check_branch
      %41 = sbr.rel (0) target = $region17
    $region16: #{tpu_custom_call.1} parent=1 // pred_region
      %s43 = ssub.s32 256, 256
      %44 = vsyncadd [#allocation7], %s43
      %s45 = sshll.u32 [#allocation8], 4
      %s46 = int_to_ptr.vmem [resolvable:$true] %s45
      %51 = dma.hbm_to_vmem [thread:$0]  %s3, 256, %s46, [#allocation7], 128, 128, 8
    $region17: #{tpu_custom_call.1} parent=1 // pred_fallthru
      _
    // Predicated region
    $region18: #{tpu_custom_call.1} parent=1 // pred_check
      _
    $region19: #{tpu_custom_call.1} parent=1 // pred_check_branch
      %53 = sbr.rel (0) target = $region21
    $region20: #{tpu_custom_call.1} parent=1 // pred_region
      _
    $region21: #{tpu_custom_call.1} parent=1 // pred_fallthru
      _
    // Predicated region
    $region22: #{tpu_custom_call.1} parent=1 // pred_check
      _
    $region23: #{tpu_custom_call.1} parent=1 // pred_check_branch
      %55 = sbr.rel (0) target = $region25
    $region24: #{tpu_custom_call.1} parent=1 // pred_region
      _
    $region25: #{tpu_custom_call.1} parent=1 // pred_fallthru
      _
    // Predicated region
    $region26: #{tpu_custom_call.1} parent=1 // pred_check
      _
    $region27: #{tpu_custom_call.1} parent=1 // pred_check_branch
      %57 = sbr.rel (0) target = $region29
    $region28: #{tpu_custom_call.1} parent=1 // pred_region
      %58 = dma.done [#allocation4], 256
    $region29: #{tpu_custom_call.1} parent=1 // pred_fallthru
      _
    // Predicated region
    $region30: #{tpu_custom_call.1} parent=1 // pred_check
      _
    $region31: #{tpu_custom_call.1} parent=1 // pred_check_branch
      %60 = sbr.rel (0) target = $region33
    $region32: #{tpu_custom_call.1} parent=1 // pred_region
      %61 = dma.done [#allocation7], 256
    $region33: #{tpu_custom_call.1} parent=1 // pred_fallthru
      _
    // Predicated region
    $region34: #{tpu_custom_call.1} parent=1 // pred_check
      _
    $region35: #{tpu_custom_call.1} parent=1 // pred_check_branch
      %63 = sbr.rel (0) target = $region37
    $region36: #{tpu_custom_call.1} parent=1 // pred_region
      %64 = dma.done [#allocation7], 256
    $region37: #{tpu_custom_call.1} parent=1 // pred_fallthru
      _
    %p65 = scmp.eq.s32.totalorder 0, 0
    // Predicated region
    $region38: #{tpu_custom_call.1} parent=1 // pred_check
      %p66 = pneg %p65
    $region39: #{tpu_custom_call.1} parent=1 // pred_check_branch
      %68 = sbr.rel (%p66) target = $region41
    $region40: #{tpu_custom_call.1} parent=1 // pred_region
      %vm69 = vcmask 261120
      %70 = vst.msk [vmem:[#allocation2] sm:$0xff] %vm69, 0.0
      %71 = vst.msk [vmem:[#allocation2 + $0x8] sm:$0xff] %vm69, 0.0
    $region41: #{tpu_custom_call.1} parent=1 // pred_fallthru
      _
    %v72 = vld [vmem:[#allocation2] sm:$0xff]
    %v73 = vld [vmem:[#allocation2 + $0x8] sm:$0xff]
    %v74 = vld [vmem:[#allocation3] sm:$0xff]
    %v75 = vld [vmem:[#allocation3 + $0x8] sm:$0xff]
    %v76 = vld [vmem:[#allocation6] sm:$0xff]
    %v77 = vld [vmem:[#allocation6 + $0x8] sm:$0xff]
    %vm78 = vcmask 130048
    %v80 = vsel %vm78, %v74, 0
    %v83 = vsel %vm78, %v75, 0
    %85 = vmatprep.subr.mxu0 0.0
    %86 = vmatpush1.msra.mxu0 %v76
    %87 = vmatprep.subr.mxu0 0.0
    %88 = vmatpush1.msra.mxu0 %v77
    %89 = vmatprep.subr.mxu0 0.0
    %90 = vmatpush1.msra.mxu0 0.0
    %91 = vmatprep.subr.mxu0 0.0
    %92 = vmatpush1.msra.mxu0 0.0
    %93 = vmatprep.subr.mxu0 0.0
    %94 = vmatpush1.msra.mxu0 0.0
    %95 = vmatprep.subr.mxu0 0.0
    %96 = vmatpush1.msra.mxu0 0.0
    %97 = vmatprep.subr.mxu0 0.0
    %98 = vmatpush1.msra.mxu0 0.0
    %99 = vmatprep.subr.mxu0 0.0
    %100 = vmatpush1.msra.mxu0 0.0
    %101 = vmatprep.subr.mxu0 0.0
    %102 = vmatpush1.msra.mxu0 0.0
    %103 = vmatprep.subr.mxu0 0.0
    %104 = vmatpush1.msra.mxu0 0.0
    %105 = vmatprep.subr.mxu0 0.0
    %106 = vmatpush1.msra.mxu0 0.0
    %107 = vmatprep.subr.mxu0 0.0
    %108 = vmatpush1.msra.mxu0 0.0
    %109 = vmatprep.subr.mxu0 0.0
    %110 = vmatpush1.msra.mxu0 0.0
    %111 = vmatprep.subr.mxu0 0.0
    %112 = vmatpush1.msra.mxu0 0.0
    %113 = vmatprep.subr.mxu0 0.0
    %114 = vmatpush1.msra.mxu0 0.0
    %115 = vmatprep.subr.mxu0 0.0
    %116 = vmatpush1.msra.mxu0 0.0
    %117 = vmatprep.subr.mxu0 0.0
    %118 = vmatpush1.msra.mxu0 0.0
    %119 = vmatprep.subr.mxu0 0.0
    %120 = vmatpush1.msra.mxu0 0.0
    %121 = vmatprep.subr.mxu0 0.0
    %122 = vmatpush1.msra.mxu0 0.0
    %123 = vmatprep.subr.mxu0 0.0
    %124 = vmatpush1.msra.mxu0 0.0
    %125 = vmatprep.subr.mxu0 0.0
    %126 = vmatpush1.msra.mxu0 0.0
    %127 = vmatprep.subr.mxu0 0.0
    %128 = vmatpush1.msra.mxu0 0.0
    %129 = vmatprep.subr.mxu0 0.0
    %130 = vmatpush1.msra.mxu0 0.0
    %131 = vmatprep.subr.mxu0 0.0
    %132 = vmatpush1.msra.mxu0 0.0
    %133 = vmatprep.subr.mxu0 0.0
    %134 = vmatpush1.msra.mxu0 0.0
    %135 = vmatprep.subr.mxu0 0.0
    %136 = vmatpush1.msra.mxu0 0.0
    %137 = vmatprep.subr.mxu0 0.0
    %138 = vmatpush1.msra.mxu0 0.0
    %139 = vmatprep.subr.mxu0 0.0
    %140 = vmatpush1.msra.mxu0 0.0
    %141 = vmatprep.subr.mxu0 0.0
    %142 = vmatpush1.msra.mxu0 0.0
    %143 = vmatprep.subr.mxu0 0.0
    %144 = vmatpush1.msra.mxu0 0.0
    %145 = vmatprep.subr.mxu0 0.0
    %146 = vmatpush1.msra.mxu0 0.0
    %147 = vmatprep.subr.mxu0 0.0
    %148 = vmatpush1.msra.mxu0 0.0
    %149 = vmatprep.mubr.f32.mxu0 0.0
    %150 = vmatmul.mubr.f32.gmra.mrb[0].mxu0 %v80
    %v151 = vpop.f32.mrb[0].mxu0
    %v152 = vadd.f32 0.0, %v151
    %v153 = vpop.f32.mrb[0].mxu0
    %154 = vmatprep.mubr.f32.mxu0 0.0
    %155 = vmatmul.mubr.f32.gmra.mrb[0].mxu0 %v83
    %v156 = vpop.f32.mrb[0].mxu0
    %v157 = vadd.f32 0.0, %v156
    %v158 = vpop.f32.mrb[0].mxu0
    %159 = vdwg.mxu0
    %v160 = vadd.f32 %v72, %v152
    %v161 = vadd.f32 %v73, %v157
    %vm162 = vcmask 261120
    %163 = vst.msk [vmem:[#allocation2] sm:$0xff] %vm162, %v160
    %164 = vst.msk [vmem:[#allocation2 + $0x8] sm:$0xff] %vm162, %v161
    // Predicated region
    $region42: #{tpu_custom_call.1} parent=1 // pred_check
      %p165 = pneg %p65
    $region43: #{tpu_custom_call.1} parent=1 // pred_check_branch
      %167 = sbr.rel (%p165) target = $region45
    $region44: #{tpu_custom_call.1} parent=1 // pred_region
      %v168 = vld [vmem:[#allocation2] sm:$0xff]
      %v169 = vld [vmem:[#allocation2 + $0x8] sm:$0xff]
      %v170 = vld [vmem:[%s2] sm:$0x1]
      %v172 = vlaneseq
      %v173 = vshrl.u32 %v172, 7
      %v174 = vsub.s32 0, %v173
      %v175 = vrot.slane %v170, %v174
      %v177 = vadd.f32 %v168, %v175
      %v178 = vadd.f32 %v169, %v175
      %v179 = vld [vmem:[#allocation8] sm:$0xff]
      %v180 = vld [vmem:[#allocation8 + $0x8] sm:$0xff]
      %v181 = vadd.f32 %v177, %v179
      %v182 = vadd.f32 %v178, %v180
      %v183 = vsel %vm162, %v181, 0.0
      %184 = vadd.xlane.f32.xlu0 %v183
      %v185 = vpop.xlane.xlu0 %184
      %v186 = vsel %vm162, %v182, 0.0
      %187 = vadd.xlane.f32.xlu0 %v186
      %v188 = vpop.xlane.xlu0 %187
      %v189 = vmul.f32 %v185, 0.03125
      %v190 = vmul.f32 %v188, 0.03125
      %v191 = vsub.f32 %v181, %v189
      %v192 = vsub.f32 %v182, %v190
      %v193 = vmul.f32 %v191, %v191
      %v194 = vmul.f32 %v192, %v192
      %v195 = vsel %vm162, %v193, 0.0
      %196 = vadd.xlane.f32.xlu0 %v195
      %v197 = vpop.xlane.xlu0 %196
      %v198 = vsel %vm162, %v194, 0.0
      %199 = vadd.xlane.f32.xlu0 %v198
      %v200 = vpop.xlane.xlu0 %199
      %v201 = vmul.f32 %v197, 0.03125
      %v202 = vmul.f32 %v200, 0.03125
      %v203 = vadd.f32 %v201, 1e-12
      %v204 = vadd.f32 %v202, 1e-12
      %v205 = vrsqrt.pop %v203
      %v206 = vrsqrt.pop %v204
      %v207 = vmul.f32 %v191, %v205
      %v208 = vmul.f32 %v192, %v206
      %v209 = vld [vmem:[%s4] sm:$0x1]
      %v211 = vlaneseq
      %v212 = vshrl.u32 %v211, 7
      %v213 = vsub.s32 0, %v212
      %v214 = vrot.slane %v209, %v213
      %v216 = vmul.f32 %v207, %v214
      %v217 = vmul.f32 %v208, %v214
      %v218 = vld [vmem:[%s5] sm:$0x1]
      %v220 = vlaneseq
      %v221 = vshrl.u32 %v220, 7
      %v222 = vsub.s32 0, %v221
      %v223 = vrot.slane %v218, %v222
      %v225 = vadd.f32 %v216, %v223
      %v226 = vadd.f32 %v217, %v223
      %227 = vst.msk [vmem:[#allocation9] sm:$0xff] %vm162, %v225
      %228 = vst.msk [vmem:[#allocation9 + $0x8] sm:$0xff] %vm162, %v226
    $region45: #{tpu_custom_call.1} parent=1 // pred_fallthru
      _
    // Predicated region
    $region46: #{tpu_custom_call.1} parent=1 // pred_check
      _
    $region47: #{tpu_custom_call.1} parent=1 // pred_check_branch
      %230 = sbr.rel (0) target = $region49
    $region48: #{tpu_custom_call.1} parent=1 // pred_region
      %s232 = ssub.s32 256, 256
      %233 = vsyncadd [#allocation5], %s232
      %s234 = sshll.u32 [#allocation9], 4
      %s235 = int_to_ptr.vmem [resolvable:$true] %s234
      %240 = dma.vmem_to_hbm [thread:$0]  %s235, 256, %s6, [#allocation5], 128, 128, 8
    $region49: #{tpu_custom_call.1} parent=1 // pred_fallthru
      _
    // Predicated region
    $region50: #{tpu_custom_call.1} parent=1 // pred_check
      _
    $region51: #{tpu_custom_call.1} parent=1 // pred_check_branch
      %242 = sbr.rel (0) target = $region53
    $region52: #{tpu_custom_call.1} parent=1 // pred_region
      %243 = dma.done [#allocation5], 256
    $region53: #{tpu_custom_call.1} parent=1 // pred_fallthru
      _
    %244 = vsyncpa [#allocation4], 1
    %245 = vsyncpa [#allocation7], 1
    %246 = vsyncpa [#allocation5], 1

// kernel: tpu_custom_call.1
$region0: #{tpu_custom_call.1}
  #allocation0 [shape = 'u32[]', space=smem, size = 0x4, offset = 0x4, fixed_abs, tag = 'smem constant byte address 0x4 - core index']
  #allocation1 [shape = 'u32[144,128]{1,0:T(1,128)}', space=vmem, size = 0x12000, scoped, tag = 'internal scratch']
  #allocation2 [shape = 'f32[16,32]{1,0:T(8,128)}', space=vmem, size = 0x2000, scoped, tag = 'scratch operand']
  %s0 = inlined_call_operand.hbm [shape: f32[16,16], index: 0, kind: input, shape index: {}]
  %s1 = inlined_call_operand.hbm [shape: f32[16,32], index: 1, kind: input, shape index: {}]
  %s2 = inlined_call_operand.vmem [shape: f32[1,32], index: 2, kind: input, shape index: {}]
  %s3 = inlined_call_operand.hbm [shape: f32[16,32], index: 3, kind: input, shape index: {}]
  %s4 = inlined_call_operand.vmem [shape: f32[1,32], index: 4, kind: input, shape index: {}]
  %s5 = inlined_call_operand.vmem [shape: f32[1,32], index: 5, kind: input, shape index: {}]
  %s6 = inlined_call_operand.hbm [shape: f32[16,32], index: 6, kind: output, shape index: {}]
  %s7 = sld [smem:[#allocation0]]
  $region54: #{tpu_custom_call.1} parent=0
    _
  %s9 = ssub.s32 1, %s7
  %s10 = scalar_select 0, %s9, %s7
  $region1: #{tpu_custom_call.1} parent=0
    #allocation3 [shape = 'u8[8192]{0}', space=vmem, size = 0x2000, scoped, tag = 'input window, operand 0, single buffered']
    #allocation4 [shape = 's32[1]{0}', space=sflag, size = 0x4, scoped, tag = 'scoped memory for tpu_custom_call.1']
    #allocation5 [shape = 's32[1]{0}', space=sflag, size = 0x4, scoped, tag = 'scoped memory for tpu_custom_call.1']
    #allocation6 [shape = 'u8[8192]{0}', space=vmem, size = 0x2000, scoped, tag = 'input window, operand 1, single buffered']
    #allocation7 [shape = 's32[1]{0}', space=sflag, size = 0x4, scoped, tag = 'scoped memory for tpu_custom_call.1']
    #allocation8 [shape = 'u8[8192]{0}', space=vmem, size = 0x2000, scoped, tag = 'input window, operand 3, single buffered']
    #allocation9 [shape = 'u8[8192]{0}', space=vmem, size = 0x2000, scoped, tag = 'output window, operand 0, single buffered']
    %11 = vsyncpa [#allocation4], 0
    %12 = vsyncpa [#allocation7], 0
    %13 = vsyncpa [#allocation5], 0
    // Predicated region
    $region2: #{tpu_custom_call.1} parent=1 // pred_check
      _
    $region3: #{tpu_custom_call.1} parent=1 // pred_check_branch
      %15 = sbr.rel (0) target = $region5
    $region4: #{tpu_custom_call.1} parent=1 // pred_region
      %s17 = ssub.s32 256, 256
      %18 = vsyncadd [#allocation4], %s17
      %s19 = sshll.u32 [#allocation3], 4
      %s20 = int_to_ptr.vmem [resolvable:$true] %s19
      %25 = dma.hbm_to_vmem [thread:$0]  %s0, 256, %s20, [#allocation4], 128, 128, 8
    $region5: #{tpu_custom_call.1} parent=1 // pred_fallthru
      _
    // Predicated region
    $region6: #{tpu_custom_call.1} parent=1 // pred_check
      _
    $region7: #{tpu_custom_call.1} parent=1 // pred_check_branch
      %27 = sbr.rel (0) target = $region9
    $region8: #{tpu_custom_call.1} parent=1 // pred_region
      %s29 = ssub.s32 256, 256
      %30 = vsyncadd [#allocation7], %s29
      %s31 = sshll.u32 [#allocation6], 4
      %s32 = int_to_ptr.vmem [resolvable:$true] %s31
      %37 = dma.hbm_to_vmem [thread:$0]  %s1, 256, %s32, [#allocation7], 128, 128, 8
    $region9: #{tpu_custom_call.1} parent=1 // pred_fallthru
      _
    // Predicated region
    $region10: #{tpu_custom_call.1} parent=1 // pred_check
      _
    $region11: #{tpu_custom_call.1} parent=1 // pred_check_branch
      %39 = sbr.rel (0) target = $region13
    $region12: #{tpu_custom_call.1} parent=1 // pred_region
      _
    $region13: #{tpu_custom_call.1} parent=1 // pred_fallthru
      _
    // Predicated region
    $region14: #{tpu_custom_call.1} parent=1 // pred_check
      _
    $region15: #{tpu_custom_call.1} parent=1 // pred_check_branch
      %41 = sbr.rel (0) target = $region17
    $region16: #{tpu_custom_call.1} parent=1 // pred_region
      %s43 = ssub.s32 256, 256
      %44 = vsyncadd [#allocation7], %s43
      %s45 = sshll.u32 [#allocation8], 4
      %s46 = int_to_ptr.vmem [resolvable:$true] %s45
      %51 = dma.hbm_to_vmem [thread:$0]  %s3, 256, %s46, [#allocation7], 128, 128, 8
    $region17: #{tpu_custom_call.1} parent=1 // pred_fallthru
      _
    // Predicated region
    $region18: #{tpu_custom_call.1} parent=1 // pred_check
      _
    $region19: #{tpu_custom_call.1} parent=1 // pred_check_branch
      %53 = sbr.rel (0) target = $region21
    $region20: #{tpu_custom_call.1} parent=1 // pred_region
      _
    $region21: #{tpu_custom_call.1} parent=1 // pred_fallthru
      _
    // Predicated region
    $region22: #{tpu_custom_call.1} parent=1 // pred_check
      _
    $region23: #{tpu_custom_call.1} parent=1 // pred_check_branch
      %55 = sbr.rel (0) target = $region25
    $region24: #{tpu_custom_call.1} parent=1 // pred_region
      _
    $region25: #{tpu_custom_call.1} parent=1 // pred_fallthru
      _
    // Predicated region
    $region26: #{tpu_custom_call.1} parent=1 // pred_check
      _
    $region27: #{tpu_custom_call.1} parent=1 // pred_check_branch
      %57 = sbr.rel (0) target = $region29
    $region28: #{tpu_custom_call.1} parent=1 // pred_region
      %58 = dma.done [#allocation4], 256
    $region29: #{tpu_custom_call.1} parent=1 // pred_fallthru
      _
    // Predicated region
    $region30: #{tpu_custom_call.1} parent=1 // pred_check
      _
    $region31: #{tpu_custom_call.1} parent=1 // pred_check_branch
      %60 = sbr.rel (0) target = $region33
    $region32: #{tpu_custom_call.1} parent=1 // pred_region
      %61 = dma.done [#allocation7], 256
    $region33: #{tpu_custom_call.1} parent=1 // pred_fallthru
      _
    // Predicated region
    $region34: #{tpu_custom_call.1} parent=1 // pred_check
      _
    $region35: #{tpu_custom_call.1} parent=1 // pred_check_branch
      %63 = sbr.rel (0) target = $region37
    $region36: #{tpu_custom_call.1} parent=1 // pred_region
      %64 = dma.done [#allocation7], 256
    $region37: #{tpu_custom_call.1} parent=1 // pred_fallthru
      _
    %p65 = scmp.eq.s32.totalorder 0, 0
    // Predicated region
    $region38: #{tpu_custom_call.1} parent=1 // pred_check
      %p66 = pneg %p65
    $region39: #{tpu_custom_call.1} parent=1 // pred_check_branch
      %68 = sbr.rel (%p66) target = $region41
    $region40: #{tpu_custom_call.1} parent=1 // pred_region
      %vm69 = vcmask 261120
      %70 = vst.msk [vmem:[#allocation2] sm:$0xff] %vm69, 0.0
      %71 = vst.msk [vmem:[#allocation2 + $0x8] sm:$0xff] %vm69, 0.0
    $region41: #{tpu_custom_call.1} parent=1 // pred_fallthru
      _
    %v72 = vld [vmem:[#allocation2] sm:$0xff]
    %v73 = vld [vmem:[#allocation2 + $0x8] sm:$0xff]
    %v74 = vld [vmem:[#allocation3] sm:$0xff]
    %v75 = vld [vmem:[#allocation3 + $0x8] sm:$0xff]
    %v76 = vld [vmem:[#allocation6] sm:$0xff]
    %v77 = vld [vmem:[#allocation6 + $0x8] sm:$0xff]
    %vm78 = vcmask 130048
    %v80 = vsel %vm78, %v74, 0
    %v83 = vsel %vm78, %v75, 0
    %85 = vmatprep.subr.mxu0 0.0
    %86 = vmatpush1.msra.mxu0 %v76
    %87 = vmatprep.subr.mxu0 0.0
    %88 = vmatpush1.msra.mxu0 %v77
    %89 = vmatprep.subr.mxu0 0.0
    %90 = vmatpush1.msra.mxu0 0.0
    %91 = vmatprep.subr.mxu0 0.0
    %92 = vmatpush1.msra.mxu0 0.0
    %93 = vmatprep.subr.mxu0 0.0
    %94 = vmatpush1.msra.mxu0 0.0
    %95 = vmatprep.subr.mxu0 0.0
    %96 = vmatpush1.msra.mxu0 0.0
    %97 = vmatprep.subr.mxu0 0.0
    %98 = vmatpush1.msra.mxu0 0.0
    %99 = vmatprep.subr.mxu0 0.0
    %100 = vmatpush1.msra.mxu0 0.0
    %101 = vmatprep.subr.mxu0 0.0
    %102 = vmatpush1.msra.mxu0 0.0
    %103 = vmatprep.subr.mxu0 0.0
    %104 = vmatpush1.msra.mxu0 0.0
    %105 = vmatprep.subr.mxu0 0.0
    %106 = vmatpush1.msra.mxu0 0.0
    %107 = vmatprep.subr.mxu0 0.0
    %108 = vmatpush1.msra.mxu0 0.0
    %109 = vmatprep.subr.mxu0 0.0
    %110 = vmatpush1.msra.mxu0 0.0
    %111 = vmatprep.subr.mxu0 0.0
    %112 = vmatpush1.msra.mxu0 0.0
    %113 = vmatprep.subr.mxu0 0.0
    %114 = vmatpush1.msra.mxu0 0.0
    %115 = vmatprep.subr.mxu0 0.0
    %116 = vmatpush1.msra.mxu0 0.0
    %117 = vmatprep.subr.mxu0 0.0
    %118 = vmatpush1.msra.mxu0 0.0
    %119 = vmatprep.subr.mxu0 0.0
    %120 = vmatpush1.msra.mxu0 0.0
    %121 = vmatprep.subr.mxu0 0.0
    %122 = vmatpush1.msra.mxu0 0.0
    %123 = vmatprep.subr.mxu0 0.0
    %124 = vmatpush1.msra.mxu0 0.0
    %125 = vmatprep.subr.mxu0 0.0
    %126 = vmatpush1.msra.mxu0 0.0
    %127 = vmatprep.subr.mxu0 0.0
    %128 = vmatpush1.msra.mxu0 0.0
    %129 = vmatprep.subr.mxu0 0.0
    %130 = vmatpush1.msra.mxu0 0.0
    %131 = vmatprep.subr.mxu0 0.0
    %132 = vmatpush1.msra.mxu0 0.0
    %133 = vmatprep.subr.mxu0 0.0
    %134 = vmatpush1.msra.mxu0 0.0
    %135 = vmatprep.subr.mxu0 0.0
    %136 = vmatpush1.msra.mxu0 0.0
    %137 = vmatprep.subr.mxu0 0.0
    %138 = vmatpush1.msra.mxu0 0.0
    %139 = vmatprep.subr.mxu0 0.0
    %140 = vmatpush1.msra.mxu0 0.0
    %141 = vmatprep.subr.mxu0 0.0
    %142 = vmatpush1.msra.mxu0 0.0
    %143 = vmatprep.subr.mxu0 0.0
    %144 = vmatpush1.msra.mxu0 0.0
    %145 = vmatprep.subr.mxu0 0.0
    %146 = vmatpush1.msra.mxu0 0.0
    %147 = vmatprep.subr.mxu0 0.0
    %148 = vmatpush1.msra.mxu0 0.0
    %149 = vmatprep.mubr.f32.mxu0 0.0
    %150 = vmatmul.mubr.f32.gmra.mrb[0].mxu0 %v80
    %v151 = vpop.f32.mrb[0].mxu0
    %v152 = vadd.f32 0.0, %v151
    %v153 = vpop.f32.mrb[0].mxu0
    %154 = vmatprep.mubr.f32.mxu0 0.0
    %155 = vmatmul.mubr.f32.gmra.mrb[0].mxu0 %v83
    %v156 = vpop.f32.mrb[0].mxu0
    %v157 = vadd.f32 0.0, %v156
    %v158 = vpop.f32.mrb[0].mxu0
    %159 = vdwg.mxu0
    %v160 = vadd.f32 %v72, %v152
    %v161 = vadd.f32 %v73, %v157
    %vm162 = vcmask 261120
    %163 = vst.msk [vmem:[#allocation2] sm:$0xff] %vm162, %v160
    %164 = vst.msk [vmem:[#allocation2 + $0x8] sm:$0xff] %vm162, %v161
    // Predicated region
    $region42: #{tpu_custom_call.1} parent=1 // pred_check
      %p165 = pneg %p65
    $region43: #{tpu_custom_call.1} parent=1 // pred_check_branch
      %167 = sbr.rel (%p165) target = $region45
    $region44: #{tpu_custom_call.1} parent=1 // pred_region
      %v168 = vld [vmem:[#allocation2] sm:$0xff]
      %v169 = vld [vmem:[#allocation2 + $0x8] sm:$0xff]
      %v170 = vld [vmem:[%s2] sm:$0x1]
      %v172 = vlaneseq
      %v173 = vshrl.u32 %v172, 7
      %v174 = vsub.s32 0, %v173
      %v175 = vrot.slane %v170, %v174
      %v177 = vadd.f32 %v168, %v175
      %v178 = vadd.f32 %v169, %v175
      %v179 = vld [vmem:[#allocation8] sm:$0xff]
      %v180 = vld [vmem:[#allocation8 + $0x8] sm:$0xff]
      %v181 = vadd.f32 %v177, %v179
      %v182 = vadd.f32 %v178, %v180
      %v183 = vsel %vm162, %v181, 0.0
      %184 = vadd.xlane.f32.xlu0 %v183
      %v185 = vpop.xlane.xlu0 %184
      %v186 = vsel %vm162, %v182, 0.0
      %187 = vadd.xlane.f32.xlu0 %v186
      %v188 = vpop.xlane.xlu0 %187
      %v189 = vmul.f32 %v185, 0.03125
      %v190 = vmul.f32 %v188, 0.03125
      %v191 = vsub.f32 %v181, %v189
      %v192 = vsub.f32 %v182, %v190
      %v193 = vmul.f32 %v191, %v191
      %v194 = vmul.f32 %v192, %v192
      %v195 = vsel %vm162, %v193, 0.0
      %196 = vadd.xlane.f32.xlu0 %v195
      %v197 = vpop.xlane.xlu0 %196
      %v198 = vsel %vm162, %v194, 0.0
      %199 = vadd.xlane.f32.xlu0 %v198
      %v200 = vpop.xlane.xlu0 %199
      %v201 = vmul.f32 %v197, 0.03125
      %v202 = vmul.f32 %v200, 0.03125
      %v203 = vadd.f32 %v201, 1e-12
      %v204 = vadd.f32 %v202, 1e-12
      %v205 = vrsqrt.pop %v203
      %v206 = vrsqrt.pop %v204
      %v207 = vmul.f32 %v191, %v205
      %v208 = vmul.f32 %v192, %v206
      %v209 = vld [vmem:[%s4] sm:$0x1]
      %v211 = vlaneseq
      %v212 = vshrl.u32 %v211, 7
      %v213 = vsub.s32 0, %v212
      %v214 = vrot.slane %v209, %v213
      %v216 = vmul.f32 %v207, %v214
      %v217 = vmul.f32 %v208, %v214
      %v218 = vld [vmem:[%s5] sm:$0x1]
      %v220 = vlaneseq
      %v221 = vshrl.u32 %v220, 7
      %v222 = vsub.s32 0, %v221
      %v223 = vrot.slane %v218, %v222
      %v225 = vadd.f32 %v216, %v223
      %v226 = vadd.f32 %v217, %v223
      %227 = vst.msk [vmem:[#allocation9] sm:$0xff] %vm162, %v225
      %228 = vst.msk [vmem:[#allocation9 + $0x8] sm:$0xff] %vm162, %v226
    $region45: #{tpu_custom_call.1} parent=1 // pred_fallthru
      _
    // Predicated region
    $region46: #{tpu_custom_call.1} parent=1 // pred_check
      _
    $region47: #{tpu_custom_call.1} parent=1 // pred_check_branch
      %230 = sbr.rel (0) target = $region49
    $region48: #{tpu_custom_call.1} parent=1 // pred_region
      %s232 = ssub.s32 256, 256
      %233 = vsyncadd [#allocation5], %s232
      %s234 = sshll.u32 [#allocation9], 4
      %s235 = int_to_ptr.vmem [resolvable:$true] %s234
      %240 = dma.vmem_to_hbm [thread:$0]  %s235, 256, %s6, [#allocation5], 128, 128, 8
    $region49: #{tpu_custom_call.1} parent=1 // pred_fallthru
      _
    // Predicated region
    $region50: #{tpu_custom_call.1} parent=1 // pred_check
      _
    $region51: #{tpu_custom_call.1} parent=1 // pred_check_branch
      %242 = sbr.rel (0) target = $region53
    $region52: #{tpu_custom_call.1} parent=1 // pred_region
      %243 = dma.done [#allocation5], 256
    $region53: #{tpu_custom_call.1} parent=1 // pred_fallthru
      _
    %244 = vsyncpa [#allocation4], 1
    %245 = vsyncpa [#allocation7], 1
    %246 = vsyncpa [#allocation5], 1

</llo_original>
